<compile_context>
chip_gen: v6e
topology: v6e:2x2x1
jax: 0.10.0
libtpu: 0.0.40
codegen_flags: <defaults>
</compile_context>

<pallas_src>
import functools

import jax
import jax.numpy as jnp
from jax import lax
from jax.experimental import pallas as pl
from jax.experimental.pallas import tpu as pltpu


def _loss_kernel(*refs, is_vae, is_cls, n_rows, block_rows, ragged,
                 mse_scale, kld_scale, bce_scale):
    """Accumulating loss kernel.

    refs = [x_rec, x] (+ [mu, log_var] if is_vae) (+ [y_pred, y] if is_cls),
           out_ref (SMEM (1,1) f32),
           acc_mse (+ acc_kld if is_vae) (+ acc_bce if is_cls)  [VMEM f32].
    """
    pos = 2
    xr_ref, x_ref = refs[0], refs[1]
    mu_ref = lv_ref = yp_ref = y_ref = None
    if is_vae:
        mu_ref, lv_ref = refs[pos], refs[pos + 1]
        pos += 2
    if is_cls:
        yp_ref, y_ref = refs[pos], refs[pos + 1]
        pos += 2
    out_ref = refs[pos]
    pos += 1
    acc_mse = refs[pos]
    pos += 1
    acc_kld = acc_bce = None
    if is_vae:
        acc_kld = refs[pos]
        pos += 1
    if is_cls:
        acc_bce = refs[pos]
        pos += 1

    i = pl.program_id(0)

    # Row mask for the ragged last block (statically elided when not needed).
    if ragged:
        rows_left = n_rows - i * block_rows          # dynamic scalar
        row_ids = lax.broadcasted_iota(jnp.int32, (block_rows, 1), 0)
        valid = row_ids < rows_left                  # (block_rows, 1) bool

        def msk(v):
            return jnp.where(valid, v, 0.0)
    else:
        def msk(v):
            return v

    @pl.when(i == 0)
    def _init():
        acc_mse[...] = jnp.zeros_like(acc_mse)
        if is_vae:
            acc_kld[...] = jnp.zeros_like(acc_kld)
        if is_cls:
            acc_bce[...] = jnp.zeros_like(acc_bce)

    # --- MSE contribution: (x_rec - x)^2, accumulated elementwise (VPU only).
    d = xr_ref[...].astype(jnp.float32) - x_ref[...].astype(jnp.float32)
    acc_mse[...] += msk(d * d)

    # --- KLD contribution: 1 + logvar - mu^2 - exp(logvar) -------------------
    if is_vae:
        mu = mu_ref[...].astype(jnp.float32)
        lv = lv_ref[...].astype(jnp.float32)
        acc_kld[...] += msk(1.0 + lv - mu * mu - jnp.exp(lv))

    # --- BCE contribution (torch.nn.BCELoss semantics: log clamped at -100) --
    if is_cls:
        p = yp_ref[...].astype(jnp.float32)
        t = y_ref[...].astype(jnp.float32)
        logp = jnp.maximum(jnp.log(p), -100.0)
        log1mp = jnp.maximum(jnp.log(1.0 - p), -100.0)
        acc_bce[...] += msk(-t * logp - (1.0 - t) * log1mp)

    # --- finalize: single reduce per term, scale and combine -----------------
    @pl.when(i == pl.num_programs(0) - 1)
    def _finalize():
        total = jnp.sum(acc_mse[...]) * mse_scale
        if is_vae:
            total = total + jnp.sum(acc_kld[...]) * kld_scale
        if is_cls:
            total = total + jnp.sum(acc_bce[...]) * bce_scale
        out_ref[0, 0] = total


def _pick_block_rows(n_rows, row_bytes, target_bytes):
    """Rows per grid step: ~target_bytes of input per step, multiple of 32."""
    if n_rows * row_bytes <= target_bytes:
        return n_rows                       # single block == full array
    br = (target_bytes // max(row_bytes, 1)) // 32 * 32
    br = max(int(br), 32)
    if br >= n_rows:
        return n_rows
    return br


def autoencoder_mse(x_rec, x, mu=None, log_var=None, y_pred=None, y=None, *,
                    is_vae_model=False, is_classifier_model=False,
                    block_rows=None, target_block_bytes=8 << 20,
                    vmem_limit_bytes=48 << 20):
    """JAX/Pallas equivalent of AutoEncoderMSE.forward."""
    assert x.ndim == 2 and x.shape == x_rec.shape, \
        f"Bad dimension {x_rec.shape} != {x.shape}"
    N, D = int(x.shape[0]), int(x.shape[1])

    use_vae = bool(is_vae_model)
    use_cls = bool(is_vae_model and is_classifier_model)

    streams = [x_rec, x]
    if use_vae:
        assert mu is not None and log_var is not None
        assert mu.ndim == 2 and mu.shape == log_var.shape and int(mu.shape[0]) == N
        streams += [mu, log_var]
    if use_cls:
        assert y_pred is not None and y is not None
        assert y_pred.shape == y.shape and int(y_pred.size) % N == 0
        # Pure (bitcast) reshape to share the batch-row grid; no pad, no copy.
        y_pred = y_pred.reshape(N, -1)
        y = y.reshape(N, -1)
        streams += [y_pred, y]

    # --- tiling: one row-block grid over the shared batch dim ---------------
    row_bytes = sum(int(a.shape[1]) * a.dtype.itemsize for a in streams)
    if block_rows is None:
        block_rows = _pick_block_rows(N, row_bytes, int(target_block_bytes))
    else:
        block_rows = int(block_rows)
        if block_rows >= N:
            block_rows = N
        else:
            block_rows = max(32, (block_rows // 32) * 32)  # layout-safe rows
    grid = -(-N // block_rows)
    ragged = (grid * block_rows) != N

    in_specs = [pl.BlockSpec((block_rows, int(a.shape[1])), lambda i: (i, 0))
                for a in streams]

    scratch = [pltpu.VMEM((block_rows, D), jnp.float32)]
    if use_vae:
        scratch.append(pltpu.VMEM((block_rows, int(mu.shape[1])), jnp.float32))
    if use_cls:
        scratch.append(pltpu.VMEM((block_rows, int(y_pred.shape[1])), jnp.float32))

    n_x = N * D
    n_m = int(mu.size) if use_vae else 0
    n_y = int(y_pred.size) if use_cls else 0

    kernel = functools.partial(
        _loss_kernel,
        is_vae=use_vae, is_cls=use_cls,
        n_rows=N, block_rows=block_rows, ragged=ragged,
        mse_scale=1.0 / float(n_x),
        kld_scale=(-0.5 / float(N)) if use_vae else 0.0,
        bce_scale=(2.0 / float(n_y)) if use_cls else 0.0,
    )

    flops = 3 * n_x + 6 * n_m + 8 * n_y
    transcendentals = n_m + 2 * n_y
    bytes_accessed = sum(int(a.size) * a.dtype.itemsize for a in streams) + 4

    out = pl.pallas_call(
        kernel,
        out_shape=jax.ShapeDtypeStruct((1, 1), jnp.float32),
        grid=(grid,),
        in_specs=in_specs,
        out_specs=pl.BlockSpec(memory_space=pltpu.MemorySpace.SMEM),
        scratch_shapes=scratch,
        compiler_params=pltpu.CompilerParams(
            dimension_semantics=("arbitrary",),
            vmem_limit_bytes=int(vmem_limit_bytes)),
        cost_estimate=pl.CostEstimate(
            flops=flops, transcendentals=transcendentals,
            bytes_accessed=bytes_accessed),
    )(*streams)
    return out[0, 0]


# --------------------------- reference & tests ------------------------------

def _reference(x_rec, x, mu=None, log_var=None, y_pred=None, y=None,
               is_vae=False, is_cls=False):
    mse = jnp.mean((x_rec.astype(jnp.float32) - x.astype(jnp.float32)) ** 2)
    if not is_vae:
        return mse
    mu = mu.astype(jnp.float32)
    log_var = log_var.astype(jnp.float32)
    kld = -0.5 * jnp.mean(jnp.sum(1.0 + log_var - mu ** 2 - jnp.exp(log_var),
                                  axis=1))
    if not is_cls:
        return mse + kld
    p = y_pred.astype(jnp.float32).reshape(-1)
    t = y.astype(jnp.float32).reshape(-1)
    logp = jnp.maximum(jnp.log(p), -100.0)
    log1mp = jnp.maximum(jnp.log(1.0 - p), -100.0)
    bce = jnp.mean(-t * logp - (1.0 - t) * log1mp)
    return mse + kld + 2.0 * bce


def _make_inputs(key, N, D, L, C):
    k1, k2, k3, k4, k5, k6 = jax.random.split(key, 6)
    x = jax.random.normal(k1, (N, D), jnp.float32)
    x_rec = x + 0.1 * jax.random.normal(k2, (N, D), jnp.float32)
    mu = 0.5 * jax.random.normal(k3, (N, L), jnp.float32)
    log_var = 0.1 * jax.random.normal(k4, (N, L), jnp.float32)
    y_pred = jax.nn.sigmoid(jax.random.normal(k5, (N, C), jnp.float32))
    y = (jax.random.uniform(k6, (N, C)) > 0.5).astype(jnp.float32)
    return x_rec, x, mu, log_var, y_pred, y


if __name__ == "__main__":
    key = jax.random.PRNGKey(0)
    k_small, k_big = jax.random.split(key)

    # --- small shapes matching the module's 2-D contract --------------------
    x_rec, x, mu, log_var, y_pred, y = _make_inputs(k_small, 8, 32, 16, 4)

    loss_mse = autoencoder_mse(x_rec, x)                       # plain AE
    loss_vae = autoencoder_mse(x_rec, x, mu, log_var,
                               is_vae_model=True)              # VAE
    loss_full = autoencoder_mse(x_rec, x, mu, log_var, y_pred, y,
                                is_vae_model=True,
                                is_classifier_model=True)      # VAE + classifier
    jax.block_until_ready((loss_mse, loss_vae, loss_full))

    assert jnp.allclose(loss_mse, _reference(x_rec, x), rtol=1e-4, atol=1e-5)
    assert jnp.allclose(loss_vae,
                        _reference(x_rec, x, mu, log_var, is_vae=True),
                        rtol=1e-4, atol=1e-5)
    assert jnp.allclose(loss_full,
                        _reference(x_rec, x, mu, log_var, y_pred, y,
                                   is_vae=True, is_cls=True),
                        rtol=1e-4, atol=1e-5)

    # --- bf16 passthrough (kernel upcasts in-register) ----------------------
    loss_bf16 = autoencoder_mse(x_rec.astype(jnp.bfloat16),
                                x.astype(jnp.bfloat16))
    jax.block_until_ready(loss_bf16)
    assert jnp.allclose(loss_bf16,
                        _reference(x_rec.astype(jnp.bfloat16),
                                   x.astype(jnp.bfloat16)),
                        rtol=5e-3, atol=1e-4)

    # --- larger / unaligned shapes: multi-block grid + ragged last block ----
    xr2, x2, mu2, lv2, yp2, y2 = _make_inputs(k_big, 300, 200, 16, 4)
    loss2 = autoencoder_mse(xr2, x2, mu2, lv2, yp2, y2,
                            is_vae_model=True, is_classifier_model=True,
                            block_rows=64)            # grid=5, ragged tail
    loss2_mse = autoencoder_mse(xr2, x2, block_rows=64)
    loss2_auto = autoencoder_mse(xr2, x2, mu2, lv2, yp2, y2,
                                 is_vae_model=True, is_classifier_model=True)
    jax.block_until_ready((loss2, loss2_mse, loss2_auto))

    ref2 = _reference(xr2, x2, mu2, lv2, yp2, y2, is_vae=True, is_cls=True)
    assert jnp.allclose(loss2, ref2, rtol=1e-4, atol=1e-5)
    assert jnp.allclose(loss2_auto, ref2, rtol=1e-4, atol=1e-5)
    assert jnp.allclose(loss2_mse, _reference(xr2, x2), rtol=1e-4, atol=1e-5)

    print("KERNEL_OK")
</pallas_src>

<mosaic_0001>
module attributes {stable_mosaic.version = 11 : i64} {
  func.func @_loss_kernel(%arg0: i32, %arg1: memref<8x32xf32, #tpu.memory_space<vmem>>, %arg2: memref<8x32xf32, #tpu.memory_space<vmem>>, %arg3: memref<1x1xf32, #tpu.memory_space<smem>>, %arg4: memref<8x32xf32, #tpu.memory_space<vmem>>) attributes {dimension_semantics = [#tpu.dimension_semantics<arbitrary>], iteration_bounds = array<i64: 1>, scalar_prefetch = 0 : i64, scratch_operands = 1 : i64, tpu.core_type = #tpu.core_type<tc>, window_params = [{transform_indices = @transform_0, window_bounds = array<i64: 8, 32>}, {transform_indices = @transform_1, window_bounds = array<i64: 8, 32>}, {transform_indices = @transform_2, window_bounds = array<i64: 1, 1>}]} {
    %c0_i32 = arith.constant 0 : i32
    %0 = arith.cmpi eq, %arg0, %c0_i32 : i32
    %1 = arith.extui %0 : i1 to i32
    %c0_i32_0 = arith.constant 0 : i32
    %2 = arith.cmpi ne, %1, %c0_i32_0 : i32
    scf.if %2 {
      %cst = arith.constant 0.000000e+00 : f32
      %13 = vector.broadcast %cst : f32 to vector<8x32xf32>
      %c0_10 = arith.constant 0 : index
      %c0_11 = arith.constant 0 : index
      %14 = vector.load %arg4[%c0_10, %c0_11] : memref<8x32xf32, #tpu.memory_space<vmem>>, vector<8x32xf32>
      tpu.vector_store %arg4[%c0_10, %c0_11], %13 {strides = array<i32>} : memref<8x32xf32, #tpu.memory_space<vmem>>, vector<8x32xf32>,
    } else {
    }
    %c0 = arith.constant 0 : index
    %c0_1 = arith.constant 0 : index
    %3 = vector.load %arg1[%c0, %c0_1] : memref<8x32xf32, #tpu.memory_space<vmem>>, vector<8x32xf32>
    %c0_2 = arith.constant 0 : index
    %c0_3 = arith.constant 0 : index
    %4 = vector.load %arg2[%c0_2, %c0_3] : memref<8x32xf32, #tpu.memory_space<vmem>>, vector<8x32xf32>
    %5 = arith.subf %3, %4 : vector<8x32xf32>
    %c0_4 = arith.constant 0 : index
    %c0_5 = arith.constant 0 : index
    %6 = vector.load %arg4[%c0_4, %c0_5] : memref<8x32xf32, #tpu.memory_space<vmem>>, vector<8x32xf32>
    %7 = arith.mulf %5, %5 : vector<8x32xf32>
    %8 = arith.addf %6, %7 : vector<8x32xf32>
    %c0_6 = arith.constant 0 : index
    %c0_7 = arith.constant 0 : index
    %9 = vector.load %arg4[%c0_6, %c0_7] : memref<8x32xf32, #tpu.memory_space<vmem>>, vector<8x32xf32>
    tpu.vector_store %arg4[%c0_6, %c0_7], %8 {strides = array<i32>} : memref<8x32xf32, #tpu.memory_space<vmem>>, vector<8x32xf32>,
    %c0_i32_8 = arith.constant 0 : i32
    %10 = arith.cmpi eq, %arg0, %c0_i32_8 : i32
    %11 = arith.extui %10 : i1 to i32
    %c0_i32_9 = arith.constant 0 : i32
    %12 = arith.cmpi ne, %11, %c0_i32_9 : i32
    scf.if %12 {
      %c0_10 = arith.constant 0 : index
      %c0_11 = arith.constant 0 : index
      %13 = vector.load %arg4[%c0_10, %c0_11] : memref<8x32xf32, #tpu.memory_space<vmem>>, vector<8x32xf32>
      %14 = vector.shape_cast %13 : vector<8x32xf32> to vector<1x8x32xf32>
      %cst = arith.constant dense<0.000000e+00> : vector<1xf32>
      %15 = vector.multi_reduction <add>, %14, %cst [1, 2] : vector<1x8x32xf32> to vector<1xf32>
      %16 = vector.shape_cast %15 : vector<1xf32> to vector<1x1x1xf32>
      %17 = vector.extract %16[0, 0, 0] : f32 from vector<1x1x1xf32>
      %cst_12 = arith.constant 3.906250e-03 : f32
      %18 = arith.mulf %17, %cst_12 : f32
      %c0_13 = arith.constant 0 : index
      %c0_14 = arith.constant 0 : index
      %19 = memref.load %arg3[%c0_13, %c0_14] : memref<1x1xf32, #tpu.memory_space<smem>>
      memref.store %18, %arg3[%c0_13, %c0_14] : memref<1x1xf32, #tpu.memory_space<smem>>
    } else {
    }
    return
  }
  func.func @transform_0(%arg0: i32) -> (i32, i32) {
    %c0_i32 = arith.constant 0 : i32
    %c0_i32_0 = arith.constant 0 : i32
    return %arg0, %c0_i32 : i32, i32
  }
  func.func @transform_1(%arg0: i32) -> (i32, i32) {
    %c0_i32 = arith.constant 0 : i32
    %c0_i32_0 = arith.constant 0 : i32
    return %arg0, %c0_i32 : i32, i32
  }
  func.func @transform_2(%arg0: i32) -> (i32, i32) {
    %c0_i32 = arith.constant 0 : i32
    %c0_i32_0 = arith.constant 0 : i32
    %c0_i32_1 = arith.constant 0 : i32
    return %c0_i32, %c0_i32_0 : i32, i32
  }
}

</mosaic_0001>

<llo_original>
// kernel: tpu_custom_call.1
$region0: #{tpu_custom_call.1}
  #allocation0 [shape = 'u32[]', space=smem, size = 0x4, offset = 0x4, fixed_abs, tag = 'smem constant byte address 0x4 - core index']
  #allocation1 [shape = 'u32[144,128]{1,0:T(1,128)}', space=vmem, size = 0x12000, scoped, tag = 'internal scratch']
  #allocation2 [shape = 'f32[8,32]{1,0:T(8,128)}', space=vmem, size = 0x1000, scoped, tag = 'scratch operand']
  %s0 = inlined_call_operand.hbm [shape: f32[8,32], index: 0, kind: input, shape index: {}]
  %s1 = inlined_call_operand.hbm [shape: f32[8,32], index: 1, kind: input, shape index: {}]
  %s2 = inlined_call_operand.hbm [shape: f32[1,1], index: 2, kind: output, shape index: {}]
  %s3 = sld [smem:[#allocation0]]
  $region34: #{tpu_custom_call.1} parent=0
    _
  %s5 = ssub.s32 1, %s3
  %s6 = scalar_select 0, %s5, %s3
  $region1: #{tpu_custom_call.1} parent=0
    #allocation3 [shape = 'u8[4096]{0}', space=vmem, size = 0x1000, scoped, tag = 'input window, operand 0, single buffered']
    #allocation4 [shape = 's32[1]{0}', space=sflag, size = 0x4, scoped, tag = 'scoped memory for tpu_custom_call.1']
    #allocation5 [shape = 's32[1]{0}', space=sflag, size = 0x4, scoped, tag = 'scoped memory for tpu_custom_call.1']
    #allocation6 [shape = 'u8[4096]{0}', space=vmem, size = 0x1000, scoped, tag = 'input window, operand 1, single buffered']
    #allocation7 [shape = 's32[1]{0}', space=sflag, size = 0x4, scoped, tag = 'scoped memory for tpu_custom_call.1']
    #allocation8 [shape = 'u8[512]{0}', space=smem, size = 0x200, scoped, tag = 'output window, operand 0, single buffered']
    %7 = vsyncpa [#allocation4], 0
    %8 = vsyncpa [#allocation7], 0
    %9 = vsyncpa [#allocation5], 0
    // Predicated region
    $region2: #{tpu_custom_call.1} parent=1 // pred_check
      _
    $region3: #{tpu_custom_call.1} parent=1 // pred_check_branch
      %11 = sbr.rel (0) target = $region5
    $region4: #{tpu_custom_call.1} parent=1 // pred_region
      %s13 = ssub.s32 128, 128
      %14 = vsyncadd [#allocation4], %s13
      %s16 = sshll.u32 [#allocation3], 4
      %s17 = int_to_ptr.vmem [resolvable:$true] %s16
      %19 = dma.hbm_to_vmem [thread:$0]  %s0, 128, %s17, [#allocation4]
    $region5: #{tpu_custom_call.1} parent=1 // pred_fallthru
      _
    // Predicated region
    $region6: #{tpu_custom_call.1} parent=1 // pred_check
      _
    $region7: #{tpu_custom_call.1} parent=1 // pred_check_branch
      %21 = sbr.rel (0) target = $region9
    $region8: #{tpu_custom_call.1} parent=1 // pred_region
      %s23 = ssub.s32 128, 128
      %24 = vsyncadd [#allocation7], %s23
      %s26 = sshll.u32 [#allocation6], 4
      %s27 = int_to_ptr.vmem [resolvable:$true] %s26
      %29 = dma.hbm_to_vmem [thread:$0]  %s1, 128, %s27, [#allocation7]
    $region9: #{tpu_custom_call.1} parent=1 // pred_fallthru
      _
    // Predicated region
    $region10: #{tpu_custom_call.1} parent=1 // pred_check
      _
    $region11: #{tpu_custom_call.1} parent=1 // pred_check_branch
      %31 = sbr.rel (0) target = $region13
    $region12: #{tpu_custom_call.1} parent=1 // pred_region
      %32 = dma.done [#allocation4], 128
    $region13: #{tpu_custom_call.1} parent=1 // pred_fallthru
      _
    // Predicated region
    $region14: #{tpu_custom_call.1} parent=1 // pred_check
      _
    $region15: #{tpu_custom_call.1} parent=1 // pred_check_branch
      %34 = sbr.rel (0) target = $region17
    $region16: #{tpu_custom_call.1} parent=1 // pred_region
      %35 = dma.done [#allocation7], 128
    $region17: #{tpu_custom_call.1} parent=1 // pred_fallthru
      _
    %p36 = scmp.eq.s32.totalorder 0, 0
    // Predicated region
    $region18: #{tpu_custom_call.1} parent=1 // pred_check
      %p37 = pneg %p36
    $region19: #{tpu_custom_call.1} parent=1 // pred_check_branch
      %39 = sbr.rel (%p37) target = $region21
    $region20: #{tpu_custom_call.1} parent=1 // pred_region
      %vm40 = vcmask 261120
      %41 = vst.msk [vmem:[#allocation2] sm:$0xff] %vm40, 0.0
    $region21: #{tpu_custom_call.1} parent=1 // pred_fallthru
      _
    %v42 = vld [vmem:[#allocation3] sm:$0xff]
    %v43 = vld [vmem:[#allocation6] sm:$0xff]
    %v44 = vsub.f32 %v42, %v43
    %v45 = vld [vmem:[#allocation2] sm:$0xff]
    %v46 = vmul.f32 %v44, %v44
    %v47 = vadd.f32 %v45, %v46
    %vm48 = vcmask 261120
    %49 = vst.msk [vmem:[#allocation2] sm:$0xff] %vm48, %v47
    // Predicated region
    $region22: #{tpu_custom_call.1} parent=1 // pred_check
      %p50 = pneg %p36
    $region23: #{tpu_custom_call.1} parent=1 // pred_check_branch
      %52 = sbr.rel (%p50) target = $region25
    $region24: #{tpu_custom_call.1} parent=1 // pred_region
      %v53 = vld [vmem:[#allocation2] sm:$0xff]
      %v54 = vsel %vm48, %v53, 0.0
      %55 = vadd.xlane.f32.xlu0 %v54
      %v56 = vpop.xlane.xlu0 %55
      %v57 = vrot.slane %v56, 4
      %v58 = vadd.f32 %v56, %v57
      %v59 = vrot.slane %v58, 2
      %v60 = vadd.f32 %v58, %v59
      %v61 = vrot.slane %v60, 1
      %v62 = vadd.f32 %v60, %v61
      %s63 = vtos %v62
      %s64 = smul.f32 %s63, 0.00390625
      %s65 = scalar_lea.smem [#allocation8], 0
      %66 = sst [smem:[%s65]] %s64
    $region25: #{tpu_custom_call.1} parent=1 // pred_fallthru
      _
    // Predicated region
    $region26: #{tpu_custom_call.1} parent=1 // pred_check
      _
    $region27: #{tpu_custom_call.1} parent=1 // pred_check_branch
      %68 = sbr.rel (0) target = $region29
    $region28: #{tpu_custom_call.1} parent=1 // pred_region
      %s70 = ssub.s32 16, 16
      %71 = vsyncadd [#allocation5], %s70
      %74 = dma.smem_to_hbm [#allocation8], 16, %s2, [#allocation5]
    $region29: #{tpu_custom_call.1} parent=1 // pred_fallthru
      _
    // Predicated region
    $region30: #{tpu_custom_call.1} parent=1 // pred_check
      _
    $region31: #{tpu_custom_call.1} parent=1 // pred_check_branch
      %76 = sbr.rel (0) target = $region33
    $region32: #{tpu_custom_call.1} parent=1 // pred_region
      %77 = dma.done [#allocation5], 16
    $region33: #{tpu_custom_call.1} parent=1 // pred_fallthru
      _
    %78 = sfence
    %79 = vsyncpa [#allocation4], 1
    %80 = vsyncpa [#allocation7], 1
    %81 = vsyncpa [#allocation5], 1

</llo_original>
